<compile_context>
chip_gen: v7x
topology: tpu7x:2x2x1
jax: 0.10.0
libtpu: 0.0.40
codegen_flags: <defaults>
</compile_context>

<pallas_src>
import math
from functools import reduce

import numpy as np
import jax
import jax.numpy as jnp
from jax.experimental import pallas as pl
from jax.experimental.pallas import tpu as pltpu


# ----------------------------------------------------------------------------
# Parameter construction (deterministic, mirrors _MK.__init__; float64 math)
# ----------------------------------------------------------------------------
def build_M_invM(shape):
    Ms, invMs = [], []
    for l in shape:
        M = np.zeros((l, l), dtype=np.float64)
        for i in range(l):
            M[i] = (np.arange(l) - (l - 1) // 2) ** i / math.factorial(i)
        Ms.append(M)
        invMs.append(np.linalg.inv(M))
    return Ms, invMs


def _round_up(x, m):
    return ((x + m - 1) // m) * m


# ----------------------------------------------------------------------------
# Pallas kernel: one B-tile matmul   (TB, K) @ (K, K) -> (TB, K)
# ----------------------------------------------------------------------------
def _mk_matmul_kernel(x_ref, wT_ref, o_ref):
    # Single MXU pass per B-tile; inputs are already f32, no converts needed.
    o_ref[...] = jnp.dot(x_ref[...], wT_ref[...],
                         preferred_element_type=jnp.float32)


# Rows per grid step.  K is tiny (e.g. 25), so 8192 rows ~= 800 KB/buffer
# (~3.2 MB total double-buffered) -- far under scoped-VMEM limits -- while each
# step moves >1 MB of HBM traffic, well past the ~0.35 us/step overhead.
_TB_MAX = 8192


def apply_kron_matmul(x_flat, wT, tb_max=_TB_MAX):
    """x_flat: (B, K) f32;  wT: (K, K) f32  (= kron(M_0,...,M_{d-1}).T)."""
    B, K = x_flat.shape
    tb_max = max(8, _round_up(tb_max, 8))
    # Single grid step for small B, otherwise full-size tiles; TB % 8 == 0 and
    # the block's last dim == full array dim K, satisfying the (8,128) rule.
    TB = min(tb_max, _round_up(B, 8))
    grid = (pl.cdiv(B, TB),)   # partial final block: reads padded, stores masked

    return pl.pallas_call(
        _mk_matmul_kernel,
        out_shape=jax.ShapeDtypeStruct((B, K), jnp.float32),
        grid_spec=pltpu.PrefetchScalarGridSpec(
            num_scalar_prefetch=0,
            grid=grid,
            in_specs=[
                # B-tiled input: block (TB, K); contiguous HBM slab per step.
                pl.BlockSpec((TB, K), lambda i: (i, 0)),
                # W^T: constant index_map -> loaded once, VMEM-resident.
                pl.BlockSpec((K, K), lambda i: (0, 0)),
            ],
            out_specs=pl.BlockSpec((TB, K), lambda i: (i, 0)),
        ),
        compiler_params=pltpu.CompilerParams(
            dimension_semantics=("parallel",),   # megacore-shard the B axis
        ),
    )(x_flat, wT)


# ----------------------------------------------------------------------------
# JAX mirror of the _MK module
# ----------------------------------------------------------------------------
class MK:
    def __init__(self, shape):
        assert len(shape) > 0
        self._size = tuple(shape)
        self._dim = len(shape)
        Ms, invMs = build_M_invM(shape)
        self._M = [jnp.asarray(m, dtype=jnp.float32) for m in Ms]
        self._invM = [jnp.asarray(m, dtype=jnp.float32) for m in invMs]
        # Precompute the fused transform matrices in float64, then cast.
        W_M = reduce(np.kron, Ms)          # (K, K), K = prod(shape)
        W_invM = reduce(np.kron, invMs)    # (K, K)
        self._wT_M = jnp.asarray(W_M.T, dtype=jnp.float32)
        self._wT_invM = jnp.asarray(W_invM.T, dtype=jnp.float32)

    @property
    def M(self):
        return list(self._M)

    @property
    def invM(self):
        return list(self._invM)

    def size(self):
        return self._size

    def dim(self):
        return self._dim

    def _packdim(self, x):
        assert x.ndim >= self.dim()
        if x.ndim == self.dim():
            x = x[jnp.newaxis]
        return x.reshape((-1,) + tuple(x.shape[-self.dim():]))

    # Hot path (used by M2K / K2M subclasses) -> single Pallas matmul.
    def _apply(self, x, wT):
        orig_shape = x.shape
        xp = self._packdim(x)                           # (B, k0, ..., k_{d-1})
        B = xp.shape[0]
        K = int(np.prod(self._size))
        x_flat = xp.reshape(B, K).astype(jnp.float32)   # free row-major reshape
        out_flat = apply_kron_matmul(x_flat, wT)
        out = out_flat.reshape((B,) + self._size)
        return out.reshape(orig_shape if x.ndim > self.dim()
                           else tuple(self._size))

    def m2k(self, m):   # moment -> kernel (uses invM)
        return self._apply(m, self._wT_invM)

    def k2m(self, k):   # kernel -> moment (uses M)
        return self._apply(k, self._wT_M)

    def forward(self):
        # Faithful to the reference: _MK.forward is `pass`.
        return None


# ----------------------------------------------------------------------------
# Reference (pure JAX) for correctness check
# ----------------------------------------------------------------------------
def ref_apply(x, m0, m1):
    xp = x.reshape((-1,) + x.shape[-2:])
    out = jnp.einsum("ip,jq,bpq->bij", m0, m1, xp)
    return out.reshape(x.shape)


if __name__ == "__main__":
    kernel_shape = (5, 5)          # typical PDE-Net finite-difference kernel
    mk = MK(kernel_shape)

    key = jax.random.PRNGKey(0)
    # batch=2, channels=4, plus the (5,5) kernel axes  -> packed B = 8
    x = jax.random.normal(key, (2, 4, 5, 5), dtype=jnp.float32)

    y_k2m = mk.k2m(x)
    y_m2k = mk.m2k(x)
    jax.block_until_ready((y_k2m, y_m2k))

    # verify against pure-JAX reference
    ref_k2m = ref_apply(x, mk.M[0], mk.M[1])
    ref_m2k = ref_apply(x, mk.invM[0], mk.invM[1])
    assert jnp.allclose(y_k2m, ref_k2m, atol=1e-4, rtol=1e-4)
    assert jnp.allclose(y_m2k, ref_m2k, atol=1e-4, rtol=1e-4)

    # exercise the multi-step grid and the masked partial final block
    # (B=260, TB=64 -> grid=5, last block has only 4 valid rows)
    xb = jax.random.normal(jax.random.PRNGKey(1), (260, 25), dtype=jnp.float32)
    yb = apply_kron_matmul(xb, mk._wT_M, tb_max=64)
    jax.block_until_ready(yb)
    assert jnp.allclose(yb, xb @ mk._wT_M, atol=1e-4, rtol=1e-4)

    # a non-multiple-of-8 tiny batch (single partial block)
    xc = jax.random.normal(jax.random.PRNGKey(2), (3, 5, 5), dtype=jnp.float32)
    yc = mk.k2m(xc)
    jax.block_until_ready(yc)
    assert jnp.allclose(yc, ref_apply(xc, mk.M[0], mk.M[1]), atol=1e-4, rtol=1e-4)

    # forward() itself is `pass` in the reference module
    assert mk.forward() is None

    print("KERNEL_OK")
</pallas_src>

<mosaic_0001>
module attributes {stable_mosaic.version = 11 : i64} {
  func.func @_mk_matmul_kernel(%arg0: i32, %arg1: memref<8x25xf32, #tpu.memory_space<vmem>>, %arg2: memref<25x25xf32, #tpu.memory_space<vmem>>, %arg3: memref<8x25xf32, #tpu.memory_space<vmem>>) attributes {dimension_semantics = [#tpu.dimension_semantics<parallel>], iteration_bounds = array<i64: 1>, scalar_prefetch = 0 : i64, scratch_operands = 0 : i64, tpu.core_type = #tpu.core_type<tc>, window_params = [{transform_indices = @transform_0, window_bounds = array<i64: 8, 25>}, {pipeline_mode = #tpu.pipeline_mode<synchronous>, transform_indices = @transform_1, window_bounds = array<i64: 25, 25>}, {transform_indices = @transform_2, window_bounds = array<i64: 8, 25>}]} {
    %c0 = arith.constant 0 : index
    %c0_0 = arith.constant 0 : index
    %0 = vector.load %arg1[%c0, %c0_0] : memref<8x25xf32, #tpu.memory_space<vmem>>, vector<8x25xf32>
    %c0_1 = arith.constant 0 : index
    %c0_2 = arith.constant 0 : index
    %1 = vector.load %arg2[%c0_1, %c0_2] : memref<25x25xf32, #tpu.memory_space<vmem>>, vector<25x25xf32>
    %cst = arith.constant dense<0.000000e+00> : vector<8x25xf32>
    %2 = tpu.matmul %0, %1, %cst {dimension_numbers = #tpu.dot_dimension_numbers<[1], [0], [0], [1], [0, 0, 1, 1], [], []>} : vector<8x25xf32>, vector<25x25xf32>, vector<8x25xf32> -> vector<8x25xf32>
    %c0_3 = arith.constant 0 : index
    %c0_4 = arith.constant 0 : index
    %3 = vector.load %arg3[%c0_3, %c0_4] : memref<8x25xf32, #tpu.memory_space<vmem>>, vector<8x25xf32>
    tpu.vector_store %arg3[%c0_3, %c0_4], %2 {strides = array<i32>} : memref<8x25xf32, #tpu.memory_space<vmem>>, vector<8x25xf32>,
    return
  }
  func.func @transform_0(%arg0: i32) -> (i32, i32) {
    %c0_i32 = arith.constant 0 : i32
    %c0_i32_0 = arith.constant 0 : i32
    return %arg0, %c0_i32 : i32, i32
  }
  func.func @transform_1(%arg0: i32) -> (i32, i32) {
    %c0_i32 = arith.constant 0 : i32
    %c0_i32_0 = arith.constant 0 : i32
    %c0_i32_1 = arith.constant 0 : i32
    return %c0_i32, %c0_i32_0 : i32, i32
  }
  func.func @transform_2(%arg0: i32) -> (i32, i32) {
    %c0_i32 = arith.constant 0 : i32
    %c0_i32_0 = arith.constant 0 : i32
    return %arg0, %c0_i32 : i32, i32
  }
}

</mosaic_0001>

<llo_original>
// kernel: tpu_custom_call.1
$region0: #{tpu_custom_call.1}
  #allocation0 [shape = 'u32[]', space=smem, size = 0x4, offset = 0x4, fixed_abs, tag = 'smem constant byte address 0x4 - core index']
  #allocation1 [shape = 'u32[144,128]{1,0:T(1,128)}', space=vmem, size = 0x12000, scoped, tag = 'internal scratch']
  %s0 = inlined_call_operand.hbm [shape: f32[8,25], index: 0, kind: input, shape index: {}]
  %s1 = inlined_call_operand.hbm [shape: f32[25,25], index: 1, kind: input, shape index: {}]
  %s2 = inlined_call_operand.hbm [shape: f32[8,25], index: 2, kind: output, shape index: {}]
  %s3 = sld [smem:[#allocation0]]
  $region26: #{tpu_custom_call.1} parent=0
    _
  %s5 = ssub.s32 1, %s3
  %s6 = scalar_select 0, %s5, %s3
  $region1: #{tpu_custom_call.1} parent=0
    #allocation2 [shape = 'u8[4096]{0}', space=vmem, size = 0x1000, scoped, tag = 'input window, operand 0, single buffered']
    #allocation3 [shape = 's32[1]{0}', space=sflag, size = 0x4, scoped, tag = 'scoped memory for tpu_custom_call.1']
    #allocation4 [shape = 's32[1]{0}', space=sflag, size = 0x4, scoped, tag = 'scoped memory for tpu_custom_call.1']
    #allocation5 [shape = 'u8[16384]{0}', space=vmem, size = 0x4000, scoped, tag = 'input window, operand 1, single buffered']
    #allocation6 [shape = 's32[1]{0}', space=sflag, size = 0x4, scoped, tag = 'scoped memory for tpu_custom_call.1']
    #allocation7 [shape = 'u8[4096]{0}', space=vmem, size = 0x1000, scoped, tag = 'output window, operand 0, single buffered']
    %7 = vsyncpa [#allocation3], 0
    %8 = vsyncpa [#allocation6], 0
    %9 = vsyncpa [#allocation4], 0
    // Predicated region
    $region2: #{tpu_custom_call.1} parent=1 // pred_check
      _
    $region3: #{tpu_custom_call.1} parent=1 // pred_check_branch
      %11 = sbr.rel (0) target = $region5
    $region4: #{tpu_custom_call.1} parent=1 // pred_region
      %s13 = ssub.s32 128, 128
      %14 = vsyncadd [#allocation3], %s13
      %s16 = sshll.u32 [#allocation2], 4
      %s17 = int_to_ptr.vmem [resolvable:$true] %s16
      %19 = dma.hbm_to_vmem [thread:$0]  %s0, 128, %s17, [#allocation3]
    $region5: #{tpu_custom_call.1} parent=1 // pred_fallthru
      _
    // Predicated region
    $region6: #{tpu_custom_call.1} parent=1 // pred_check
      _
    $region7: #{tpu_custom_call.1} parent=1 // pred_check_branch
      %21 = sbr.rel (0) target = $region9
    $region8: #{tpu_custom_call.1} parent=1 // pred_region
      %s23 = ssub.s32 512, 512
      %24 = vsyncadd [#allocation6], %s23
      %s25 = sshll.u32 [#allocation5], 4
      %s26 = int_to_ptr.vmem [resolvable:$true] %s25
      %31 = dma.hbm_to_vmem [thread:$0]  %s1, 512, %s26, [#allocation6], 128, 128, 8
    $region9: #{tpu_custom_call.1} parent=1 // pred_fallthru
      _
    // Predicated region
    $region10: #{tpu_custom_call.1} parent=1 // pred_check
      _
    $region11: #{tpu_custom_call.1} parent=1 // pred_check_branch
      %33 = sbr.rel (0) target = $region13
    $region12: #{tpu_custom_call.1} parent=1 // pred_region
      %34 = dma.done [#allocation3], 128
    $region13: #{tpu_custom_call.1} parent=1 // pred_fallthru
      _
    // Predicated region
    $region14: #{tpu_custom_call.1} parent=1 // pred_check
      _
    $region15: #{tpu_custom_call.1} parent=1 // pred_check_branch
      %36 = sbr.rel (0) target = $region17
    $region16: #{tpu_custom_call.1} parent=1 // pred_region
      %37 = dma.done [#allocation6], 512
    $region17: #{tpu_custom_call.1} parent=1 // pred_fallthru
      _
    %v38 = vld [vmem:[#allocation2] sm:$0xff]
    %v39 = vld [vmem:[#allocation5] sm:$0xff]
    %v40 = vld [vmem:[#allocation5 + $0x8] sm:$0xff]
    %v41 = vld [vmem:[#allocation5 + $0x10] sm:$0xff]
    %v42 = vld [vmem:[#allocation5 + $0x18] sm:$0x1]
    %vm43 = vcmask 203776
    %v45 = vsel %vm43, %v38, 0
    %vm47 = vcmask 1040384
    %v49 = vsel %vm47, %v42, 0
    %51 = vmatprep.subr.mxu0 0.0
    %52 = vmatpush1.msra.mxu0 %v39
    %53 = vmatprep.subr.mxu0 0.0
    %54 = vmatpush1.msra.mxu0 %v40
    %55 = vmatprep.subr.mxu0 0.0
    %56 = vmatpush1.msra.mxu0 %v41
    %57 = vmatprep.subr.mxu0 0.0
    %58 = vmatpush1.msra.mxu0 %v49
    %59 = vmatprep.subr.mxu0 0.0
    %60 = vmatpush1.msra.mxu0 0.0
    %61 = vmatprep.subr.mxu0 0.0
    %62 = vmatpush1.msra.mxu0 0.0
    %63 = vmatprep.subr.mxu0 0.0
    %64 = vmatpush1.msra.mxu0 0.0
    %65 = vmatprep.subr.mxu0 0.0
    %66 = vmatpush1.msra.mxu0 0.0
    %67 = vmatprep.subr.mxu0 0.0
    %68 = vmatpush1.msra.mxu0 0.0
    %69 = vmatprep.subr.mxu0 0.0
    %70 = vmatpush1.msra.mxu0 0.0
    %71 = vmatprep.subr.mxu0 0.0
    %72 = vmatpush1.msra.mxu0 0.0
    %73 = vmatprep.subr.mxu0 0.0
    %74 = vmatpush1.msra.mxu0 0.0
    %75 = vmatprep.subr.mxu0 0.0
    %76 = vmatpush1.msra.mxu0 0.0
    %77 = vmatprep.subr.mxu0 0.0
    %78 = vmatpush1.msra.mxu0 0.0
    %79 = vmatprep.subr.mxu0 0.0
    %80 = vmatpush1.msra.mxu0 0.0
    %81 = vmatprep.subr.mxu0 0.0
    %82 = vmatpush1.msra.mxu0 0.0
    %83 = vmatprep.subr.mxu0 0.0
    %84 = vmatpush1.msra.mxu0 0.0
    %85 = vmatprep.subr.mxu0 0.0
    %86 = vmatpush1.msra.mxu0 0.0
    %87 = vmatprep.subr.mxu0 0.0
    %88 = vmatpush1.msra.mxu0 0.0
    %89 = vmatprep.subr.mxu0 0.0
    %90 = vmatpush1.msra.mxu0 0.0
    %91 = vmatprep.subr.mxu0 0.0
    %92 = vmatpush1.msra.mxu0 0.0
    %93 = vmatprep.subr.mxu0 0.0
    %94 = vmatpush1.msra.mxu0 0.0
    %95 = vmatprep.subr.mxu0 0.0
    %96 = vmatpush1.msra.mxu0 0.0
    %97 = vmatprep.subr.mxu0 0.0
    %98 = vmatpush1.msra.mxu0 0.0
    %99 = vmatprep.subr.mxu0 0.0
    %100 = vmatpush1.msra.mxu0 0.0
    %101 = vmatprep.subr.mxu0 0.0
    %102 = vmatpush1.msra.mxu0 0.0
    %103 = vmatprep.subr.mxu0 0.0
    %104 = vmatpush1.msra.mxu0 0.0
    %105 = vmatprep.subr.mxu0 0.0
    %106 = vmatpush1.msra.mxu0 0.0
    %107 = vmatprep.subr.mxu0 0.0
    %108 = vmatpush1.msra.mxu0 0.0
    %109 = vmatprep.subr.mxu0 0.0
    %110 = vmatpush1.msra.mxu0 0.0
    %111 = vmatprep.subr.mxu0 0.0
    %112 = vmatpush1.msra.mxu0 0.0
    %113 = vmatprep.subr.mxu0 0.0
    %114 = vmatpush1.msra.mxu0 0.0
    %115 = vmatprep.mubr.f32.mxu0 0.0
    %116 = vmatmul.mubr.f32.gmra.mrb[0].mxu0 %v45
    %v117 = vpop.f32.mrb[0].mxu0
    %v118 = vadd.f32 0.0, %v117
    %v119 = vpop.f32.mrb[0].mxu0
    %120 = vdwg.mxu0
    %121 = vst.msk [vmem:[#allocation7] sm:$0xff] %vm43, %v118
    // Predicated region
    $region18: #{tpu_custom_call.1} parent=1 // pred_check
      _
    $region19: #{tpu_custom_call.1} parent=1 // pred_check_branch
      %123 = sbr.rel (0) target = $region21
    $region20: #{tpu_custom_call.1} parent=1 // pred_region
      %s125 = ssub.s32 128, 128
      %126 = vsyncadd [#allocation4], %s125
      %s128 = sshll.u32 [#allocation7], 4
      %s129 = int_to_ptr.vmem [resolvable:$true] %s128
      %131 = dma.vmem_to_hbm [thread:$0]  %s129, 128, %s2, [#allocation4]
    $region21: #{tpu_custom_call.1} parent=1 // pred_fallthru
      _
    // Predicated region
    $region22: #{tpu_custom_call.1} parent=1 // pred_check
      _
    $region23: #{tpu_custom_call.1} parent=1 // pred_check_branch
      %133 = sbr.rel (0) target = $region25
    $region24: #{tpu_custom_call.1} parent=1 // pred_region
      %134 = dma.done [#allocation4], 128
    $region25: #{tpu_custom_call.1} parent=1 // pred_fallthru
      _
    %135 = vsyncpa [#allocation3], 1
    %136 = vsyncpa [#allocation6], 1
    %137 = vsyncpa [#allocation4], 1

</llo_original>
